<compile_context>
chip_gen: v5e
topology: v5e:2x2
jax: 0.10.0
libtpu: 0.0.40
codegen_flags: <defaults>
</compile_context>

<pallas_src>
import jax
import jax.numpy as jnp
from jax import lax
from jax.experimental import pallas as pl
from jax.experimental.pallas import tpu as pltpu
import numpy as np

_LANE = 128
_SUBLANE = 8


def _tloss_numerator_kernel(pred_ref, tgt_ref, lamexp_ref, num_ref, acc_ref):
    """Accumulate sum_n (pred - tgt)^2 * lam_exp over the tiled N axis."""
    j = pl.program_id(1)

    @pl.when(j == 0)
    def _():
        acc_ref[...] = jnp.zeros_like(acc_ref)

    delta = pred_ref[...] - tgt_ref[...]             # (Bt, Tn) f32
    weighted = delta * delta * lamexp_ref[...]       # (1, Tn) broadcasts
    acc_ref[...] += jnp.sum(weighted, axis=1, keepdims=True)

    @pl.when(j == pl.num_programs(1) - 1)
    def _():
        num_ref[...] = acc_ref[...]


def _pad_to(x, multiple, axis):
    size = x.shape[axis]
    pad = (-size) % multiple
    if pad == 0:
        return x
    widths = [(0, 0)] * x.ndim
    widths[axis] = (0, pad)
    return jnp.pad(x, widths)


def _choose_tile_n(n_padded, max_tile_n):
    """Largest multiple of 128 <= max_tile_n that divides n_padded."""
    tn = min(max_tile_n, n_padded)
    tn -= tn % _LANE
    tn = max(tn, _LANE)
    while n_padded % tn != 0:
        tn -= _LANE
    return tn


def _tloss_pallas_numerator(pred2d, tgt2d, lam_exp, *, tile_b=_SUBLANE,
                            max_tile_n=65536):
    """pred2d/tgt2d: (B, N) f32, lam_exp: (N,) f32 -> per-batch numerator (B,)."""
    B, N = pred2d.shape

    # Lane-dense zero padding: N -> multiple of 128, B -> multiple of tile_b.
    # Zero-padded lam_exp (and pred==tgt==0 rows) contribute exactly 0.
    pred_p = _pad_to(_pad_to(pred2d, _LANE, axis=1), tile_b, axis=0)
    tgt_p = _pad_to(_pad_to(tgt2d, _LANE, axis=1), tile_b, axis=0)
    lam_p = _pad_to(lam_exp.reshape(1, N), _LANE, axis=1)
    Bp, Np = pred_p.shape

    tn = _choose_tile_n(Np, max_tile_n)
    grid = (Bp // tile_b, Np // tn)      # reduction (N) axis last

    cost = pl.CostEstimate(
        flops=3 * Bp * Np,
        transcendentals=0,
        bytes_accessed=2 * Bp * Np * 4 + Np * 4 + Bp * 4,
    )

    num = pl.pallas_call(
        _tloss_numerator_kernel,
        out_shape=jax.ShapeDtypeStruct((Bp, 1), jnp.float32),
        grid_spec=pltpu.PrefetchScalarGridSpec(
            num_scalar_prefetch=0,
            grid=grid,
            in_specs=[
                pl.BlockSpec((tile_b, tn), lambda i, j: (i, j)),   # pred
                pl.BlockSpec((tile_b, tn), lambda i, j: (i, j)),   # target
                pl.BlockSpec((1, tn), lambda i, j: (0, j)),        # lam_exp
            ],
            out_specs=pl.BlockSpec((tile_b, 1), lambda i, j: (i, 0)),
            scratch_shapes=[pltpu.VMEM((tile_b, 1), jnp.float32)],
        ),
        compiler_params=pltpu.CompilerParams(
            dimension_semantics=("parallel", "arbitrary"),
            vmem_limit_bytes=32 * 1024 * 1024,   # fits v7x's 64 MiB with headroom
        ),
        cost_estimate=cost,
    )(pred_p, tgt_p, lam_p)

    return num[:B, 0]


def tloss(pred, tgt, lambdas, nu, img_size, epsilon=1e-8, reduction="mean",
          max_tile_n=65536):
    """Matches TLoss.forward semantics. pred/tgt: (B, W, H) float32."""
    pred = pred.astype(jnp.float32)
    tgt = tgt.astype(jnp.float32)
    lambdas = lambdas.astype(jnp.float32)
    nu = jnp.asarray(nu, jnp.float32)
    eps = jnp.float32(epsilon)
    D = jnp.float32(img_size * img_size)

    B = pred.shape[0]
    N = img_size * img_size
    pred2d = pred.reshape(B, N)
    tgt2d = tgt.reshape(B, N)

    # Hoisted lambda work (tiny, O(W*H)) in plain JAX; epsilon threaded here.
    lam_exp = jnp.exp(lambdas + eps).reshape(N)
    lam_sum = jnp.sum(lambdas + eps)

    numerator = _tloss_pallas_numerator(pred2d, tgt2d, lam_exp,
                                        max_tile_n=max_tile_n)   # (B,)

    sum_nu_epsilon = jnp.exp(nu) + eps
    first_term = -lax.lgamma((sum_nu_epsilon + D) / 2)
    second_term = lax.lgamma(sum_nu_epsilon / 2)
    third_term = -0.5 * lam_sum
    fourth_term = D / 2 * jnp.log(jnp.float32(np.pi))
    fifth_term = D / 2 * (nu + eps)
    fraction = numerator / sum_nu_epsilon
    sixth_term = (sum_nu_epsilon + D) / 2 * jnp.log(1 + fraction)

    total_losses = (first_term + second_term + third_term
                    + fourth_term + fifth_term + sixth_term)

    if reduction == "mean":
        return total_losses.mean()
    elif reduction == "sum":
        return total_losses.sum()
    elif reduction == "none":
        return total_losses
    else:
        raise ValueError(f"The reduction method '{reduction}' is not implemented.")


def _tloss_reference(pred, tgt, lambdas, nu, img_size, epsilon=1e-8,
                     reduction="mean"):
    """Pure-JAX reference mirroring the PyTorch code (for validation)."""
    D = jnp.float32(img_size * img_size)
    delta = pred - tgt
    sum_nu_epsilon = jnp.exp(nu) + epsilon
    first = -lax.lgamma((sum_nu_epsilon + D) / 2)
    second = lax.lgamma(sum_nu_epsilon / 2)
    third = -0.5 * jnp.sum(lambdas + epsilon)
    fourth = D / 2 * jnp.log(jnp.float32(np.pi))
    fifth = D / 2 * (nu + epsilon)
    num = jnp.sum(delta ** 2 * jnp.exp(lambdas + epsilon), axis=(1, 2))
    sixth = (sum_nu_epsilon + D) / 2 * jnp.log(1 + num / sum_nu_epsilon)
    total = first + second + third + fourth + fifth + sixth
    if reduction == "mean":
        return total.mean()
    elif reduction == "sum":
        return total.sum()
    return total


if __name__ == "__main__":
    key = jax.random.PRNGKey(0)

    # Case 1: mirrors TLoss(img_size=16, nu=1.0), B=2, mean reduction.
    img_size = 16
    B = 2
    nu = jnp.float32(1.0)
    lambdas = jnp.ones((img_size, img_size), jnp.float32)
    epsilon = 1e-8
    k1, k2, k3, k4, k5 = jax.random.split(key, 5)
    pred = jax.random.normal(k1, (B, img_size, img_size), dtype=jnp.float32)
    tgt = jax.random.normal(k2, (B, img_size, img_size), dtype=jnp.float32)

    out = tloss(pred, tgt, lambdas, nu, img_size, epsilon, reduction="mean")
    out = jax.block_until_ready(out)
    ref = _tloss_reference(pred, tgt, lambdas, nu, img_size, epsilon, "mean")
    np.testing.assert_allclose(np.asarray(out), np.asarray(ref),
                               rtol=1e-5, atol=1e-5)

    # Case 2: exercises N padding (576 -> 640), B padding (3 -> 8), multi-step
    # reduction grid (max_tile_n=128 -> 5 N-steps), non-default epsilon,
    # non-uniform lambdas, reduction='none'.
    img_size2 = 24
    B2 = 3
    nu2 = jnp.float32(0.5)
    eps2 = 1e-6
    lambdas2 = 0.1 * jax.random.normal(k3, (img_size2, img_size2),
                                       dtype=jnp.float32)
    pred2 = jax.random.normal(k4, (B2, img_size2, img_size2), dtype=jnp.float32)
    tgt2 = jax.random.normal(k5, (B2, img_size2, img_size2), dtype=jnp.float32)

    out2 = tloss(pred2, tgt2, lambdas2, nu2, img_size2, eps2,
                 reduction="none", max_tile_n=128)
    out2 = jax.block_until_ready(out2)
    ref2 = _tloss_reference(pred2, tgt2, lambdas2, nu2, img_size2, eps2, "none")
    np.testing.assert_allclose(np.asarray(out2), np.asarray(ref2),
                               rtol=1e-5, atol=1e-5)

    print("KERNEL_OK")
</pallas_src>

<mosaic_0001>
module attributes {stable_mosaic.version = 11 : i64} {
  func.func @_tloss_numerator_kernel(%arg0: i32, %arg1: i32, %arg2: memref<8x256xf32, #tpu.memory_space<vmem>>, %arg3: memref<8x256xf32, #tpu.memory_space<vmem>>, %arg4: memref<1x256xf32, #tpu.memory_space<vmem>>, %arg5: memref<8x1xf32, #tpu.memory_space<vmem>>, %arg6: memref<8x1xf32, #tpu.memory_space<vmem>>) attributes {dimension_semantics = [#tpu.dimension_semantics<parallel>, #tpu.dimension_semantics<arbitrary>], iteration_bounds = array<i64: 1, 1>, scalar_prefetch = 0 : i64, scratch_operands = 1 : i64, tpu.core_type = #tpu.core_type<tc>, window_params = [{transform_indices = @transform_0, window_bounds = array<i64: 8, 256>}, {transform_indices = @transform_1, window_bounds = array<i64: 8, 256>}, {transform_indices = @transform_2, window_bounds = array<i64: 1, 256>}, {transform_indices = @transform_3, window_bounds = array<i64: 8, 1>}]} {
    %c0_i32 = arith.constant 0 : i32
    %0 = arith.cmpi eq, %arg1, %c0_i32 : i32
    %1 = arith.extui %0 : i1 to i32
    %c0_i32_0 = arith.constant 0 : i32
    %2 = arith.cmpi ne, %1, %c0_i32_0 : i32
    scf.if %2 {
      %cst_12 = arith.constant 0.000000e+00 : f32
      %18 = vector.broadcast %cst_12 : f32 to vector<8x1xf32>
      %c0_13 = arith.constant 0 : index
      %c0_14 = arith.constant 0 : index
      %19 = vector.load %arg6[%c0_13, %c0_14] : memref<8x1xf32, #tpu.memory_space<vmem>>, vector<8x1xf32>
      tpu.vector_store %arg6[%c0_13, %c0_14], %18 {strides = array<i32>} : memref<8x1xf32, #tpu.memory_space<vmem>>, vector<8x1xf32>,
    } else {
    }
    %c0 = arith.constant 0 : index
    %c0_1 = arith.constant 0 : index
    %3 = vector.load %arg2[%c0, %c0_1] : memref<8x256xf32, #tpu.memory_space<vmem>>, vector<8x256xf32>
    %c0_2 = arith.constant 0 : index
    %c0_3 = arith.constant 0 : index
    %4 = vector.load %arg3[%c0_2, %c0_3] : memref<8x256xf32, #tpu.memory_space<vmem>>, vector<8x256xf32>
    %5 = arith.subf %3, %4 : vector<8x256xf32>
    %6 = arith.mulf %5, %5 : vector<8x256xf32>
    %c0_4 = arith.constant 0 : index
    %c0_5 = arith.constant 0 : index
    %7 = vector.load %arg4[%c0_4, %c0_5] : memref<1x256xf32, #tpu.memory_space<vmem>>, vector<1x256xf32>
    %8 = vector.broadcast %7 : vector<1x256xf32> to vector<8x256xf32>
    %9 = arith.mulf %6, %8 : vector<8x256xf32>
    %c0_6 = arith.constant 0 : index
    %c0_7 = arith.constant 0 : index
    %10 = vector.load %arg6[%c0_6, %c0_7] : memref<8x1xf32, #tpu.memory_space<vmem>>, vector<8x1xf32>
    %cst = arith.constant dense<0.000000e+00> : vector<8xf32>
    %11 = vector.multi_reduction <add>, %9, %cst [1] : vector<8x256xf32> to vector<8xf32>
    %12 = vector.shape_cast %11 : vector<8xf32> to vector<8x1xf32>
    %13 = arith.addf %10, %12 : vector<8x1xf32>
    %c0_8 = arith.constant 0 : index
    %c0_9 = arith.constant 0 : index
    %14 = vector.load %arg6[%c0_8, %c0_9] : memref<8x1xf32, #tpu.memory_space<vmem>>, vector<8x1xf32>
    tpu.vector_store %arg6[%c0_8, %c0_9], %13 {strides = array<i32>} : memref<8x1xf32, #tpu.memory_space<vmem>>, vector<8x1xf32>,
    %c0_i32_10 = arith.constant 0 : i32
    %15 = arith.cmpi eq, %arg1, %c0_i32_10 : i32
    %16 = arith.extui %15 : i1 to i32
    %c0_i32_11 = arith.constant 0 : i32
    %17 = arith.cmpi ne, %16, %c0_i32_11 : i32
    scf.if %17 {
      %c0_12 = arith.constant 0 : index
      %c0_13 = arith.constant 0 : index
      %18 = vector.load %arg6[%c0_12, %c0_13] : memref<8x1xf32, #tpu.memory_space<vmem>>, vector<8x1xf32>
      %c0_14 = arith.constant 0 : index
      %c0_15 = arith.constant 0 : index
      %19 = vector.load %arg5[%c0_14, %c0_15] : memref<8x1xf32, #tpu.memory_space<vmem>>, vector<8x1xf32>
      tpu.vector_store %arg5[%c0_14, %c0_15], %18 {strides = array<i32>} : memref<8x1xf32, #tpu.memory_space<vmem>>, vector<8x1xf32>,
    } else {
    }
    return
  }
  func.func @transform_0(%arg0: i32, %arg1: i32) -> (i32, i32) {
    %c0_i32 = arith.constant 0 : i32
    return %arg0, %arg1 : i32, i32
  }
  func.func @transform_1(%arg0: i32, %arg1: i32) -> (i32, i32) {
    %c0_i32 = arith.constant 0 : i32
    return %arg0, %arg1 : i32, i32
  }
  func.func @transform_2(%arg0: i32, %arg1: i32) -> (i32, i32) {
    %c0_i32 = arith.constant 0 : i32
    %c0_i32_0 = arith.constant 0 : i32
    return %c0_i32, %arg1 : i32, i32
  }
  func.func @transform_3(%arg0: i32, %arg1: i32) -> (i32, i32) {
    %c0_i32 = arith.constant 0 : i32
    %c0_i32_0 = arith.constant 0 : i32
    return %arg0, %c0_i32 : i32, i32
  }
}

</mosaic_0001>

<llo_original>
// kernel: tpu_custom_call.1
$region0: #{tpu_custom_call.1}
  #allocation0 [shape = 'u32[]', space=smem, size = 0x4, offset = 0x4, fixed_abs, tag = 'smem constant byte address 0x4 - core index']
  #allocation1 [shape = 'u32[72,128]{1,0:T(1,128)}', space=vmem, size = 0x9000, scoped, tag = 'internal scratch']
  #allocation2 [shape = 'f32[8,1]{1,0:T(8,128)}', space=vmem, size = 0x1000, scoped, tag = 'scratch operand']
  %s0 = inlined_call_operand.hbm [shape: f32[8,256], index: 0, kind: input, shape index: {}]
  %s1 = inlined_call_operand.hbm [shape: f32[8,256], index: 1, kind: input, shape index: {}]
  %s2 = inlined_call_operand.hbm [shape: f32[1,256], index: 2, kind: input, shape index: {}]
  %s3 = inlined_call_operand.vmem [shape: f32[8,1], index: 3, kind: output, shape index: {}]
  %s4 = sld [smem:[#allocation0]]
  $region42: #{tpu_custom_call.1} parent=0
    _
  %s6 = ssub.s32 1, %s4
  %s7 = scalar_select 0, %s6, %s4
  $region1: #{tpu_custom_call.1} parent=0
    #allocation3 [shape = 'u8[8192]{0}', space=vmem, size = 0x2000, scoped, tag = 'input window, operand 0, single buffered']
    #allocation4 [shape = 's32[1]{0}', space=sflag, size = 0x4, scoped, tag = 'scoped memory for tpu_custom_call.1']
    #allocation5 [shape = 'u8[8192]{0}', space=vmem, size = 0x2000, scoped, tag = 'input window, operand 1, single buffered']
    #allocation6 [shape = 's32[1]{0}', space=sflag, size = 0x4, scoped, tag = 'scoped memory for tpu_custom_call.1']
    #allocation7 [shape = 'u8[1024]{0}', space=vmem, size = 0x400, scoped, tag = 'input window, operand 2, single buffered']
    %8 = vsyncpa [#allocation4], 0
    %9 = vsyncpa [#allocation6], 0
    // Predicated region
    $region2: #{tpu_custom_call.1} parent=1 // pred_check
      _
    $region3: #{tpu_custom_call.1} parent=1 // pred_check_branch
      %11 = sbr.rel (0) target = $region5
    $region4: #{tpu_custom_call.1} parent=1 // pred_region
      %13 = vsyncadd [#allocation4], 0
      %s15 = sshll.u32 %s0, 4
      %s16 = int_to_ptr.hbm [resolvable:$true] %s15
      %s17 = sshll.u32 [#allocation3], 4
      %s18 = int_to_ptr.vmem [resolvable:$true] %s17
      %20 = dma.hbm_to_vmem [thread:$0]  %s16, 256, %s18, [#allocation4]
    $region5: #{tpu_custom_call.1} parent=1 // pred_fallthru
      _
    // Predicated region
    $region6: #{tpu_custom_call.1} parent=1 // pred_check
      _
    $region7: #{tpu_custom_call.1} parent=1 // pred_check_branch
      %22 = sbr.rel (0) target = $region9
    $region8: #{tpu_custom_call.1} parent=1 // pred_region
      %24 = vsyncadd [#allocation6], 0
      %s26 = sshll.u32 %s1, 4
      %s27 = int_to_ptr.hbm [resolvable:$true] %s26
      %s28 = sshll.u32 [#allocation5], 4
      %s29 = int_to_ptr.vmem [resolvable:$true] %s28
      %31 = dma.hbm_to_vmem [thread:$0]  %s27, 256, %s29, [#allocation6]
    $region9: #{tpu_custom_call.1} parent=1 // pred_fallthru
      _
    // Predicated region
    $region10: #{tpu_custom_call.1} parent=1 // pred_check
      _
    $region11: #{tpu_custom_call.1} parent=1 // pred_check_branch
      %33 = sbr.rel (0) target = $region13
    $region12: #{tpu_custom_call.1} parent=1 // pred_region
      %35 = vsyncadd [#allocation6], 0
      %s37 = sshll.u32 %s2, 4
      %s38 = int_to_ptr.hbm [resolvable:$true] %s37
      %s39 = sshll.u32 [#allocation7], 4
      %s40 = int_to_ptr.vmem [resolvable:$true] %s39
      %42 = dma.hbm_to_vmem [thread:$0]  %s38, 32, %s40, [#allocation6]
    $region13: #{tpu_custom_call.1} parent=1 // pred_fallthru
      _
    // Predicated region
    $region14: #{tpu_custom_call.1} parent=1 // pred_check
      _
    $region15: #{tpu_custom_call.1} parent=1 // pred_check_branch
      %44 = sbr.rel (0) target = $region17
    $region16: #{tpu_custom_call.1} parent=1 // pred_region
      %46 = dma.done [#allocation4], 256
    $region17: #{tpu_custom_call.1} parent=1 // pred_fallthru
      _
    // Predicated region
    $region18: #{tpu_custom_call.1} parent=1 // pred_check
      _
    $region19: #{tpu_custom_call.1} parent=1 // pred_check_branch
      %48 = sbr.rel (0) target = $region21
    $region20: #{tpu_custom_call.1} parent=1 // pred_region
      %50 = dma.done [#allocation6], 256
    $region21: #{tpu_custom_call.1} parent=1 // pred_fallthru
      _
    // Predicated region
    $region22: #{tpu_custom_call.1} parent=1 // pred_check
      _
    $region23: #{tpu_custom_call.1} parent=1 // pred_check_branch
      %52 = sbr.rel (0) target = $region25
    $region24: #{tpu_custom_call.1} parent=1 // pred_region
      %54 = dma.done [#allocation6], 32
    $region25: #{tpu_custom_call.1} parent=1 // pred_fallthru
      _
    %p55 = scmp.eq.s32.totalorder 0, 0
    // Predicated region
    $region26: #{tpu_custom_call.1} parent=1 // pred_check
      %p56 = pneg %p55
    $region27: #{tpu_custom_call.1} parent=1 // pred_check_branch
      %58 = sbr.rel (%p56) target = $region29
    $region28: #{tpu_custom_call.1} parent=1 // pred_region
      %vm59 = vcmask 7168
      %60 = vst.msk [vmem:[#allocation2] sm:$0xff] %vm59, 0.0
    $region29: #{tpu_custom_call.1} parent=1 // pred_fallthru
      _
    %v61 = vld [vmem:[#allocation3] sm:$0xff]
    %v62 = vld [vmem:[#allocation3 + $0x8] sm:$0xff]
    %v63 = vld [vmem:[#allocation5] sm:$0xff]
    %v64 = vld [vmem:[#allocation5 + $0x8] sm:$0xff]
    %v65 = vsub.f32 %v61, %v63
    %v66 = vsub.f32 %v62, %v64
    %v67 = vmul.f32 %v65, %v65
    %v68 = vmul.f32 %v66, %v66
    %v69 = vld [vmem:[#allocation7] sm:$0x3]
    %v71 = vperm.slane %v69, 0
    %v72 = vperm.slane %v69, 1
    %v75 = vmul.f32 %v67, %v71
    %v76 = vmul.f32 %v68, %v72
    %v77 = vld [vmem:[#allocation2] sm:$0xff]
    %v78 = vadd.f32 %v75, %v76
    %79 = vadd.xlane.f32.xlu0 %v78
    %v80 = vpop.xlane.xlu0 %79
    %v81 = vadd.f32 %v77, %v80
    %vm82 = vcmask 7168
    %83 = vst.msk [vmem:[#allocation2] sm:$0xff] %vm82, %v81
    // Predicated region
    $region30: #{tpu_custom_call.1} parent=1 // pred_check
      %p84 = pneg %p55
    $region31: #{tpu_custom_call.1} parent=1 // pred_check_branch
      %86 = sbr.rel (%p84) target = $region33
    $region32: #{tpu_custom_call.1} parent=1 // pred_region
      %v87 = vld [vmem:[#allocation2] sm:$0xff]
      %88 = vst.msk [vmem:[%s3] sm:$0xff] %vm82, %v87
    $region33: #{tpu_custom_call.1} parent=1 // pred_fallthru
      _
    // Predicated region
    $region34: #{tpu_custom_call.1} parent=1 // pred_check
      _
    $region35: #{tpu_custom_call.1} parent=1 // pred_check_branch
      %90 = sbr.rel (0) target = $region37
    $region36: #{tpu_custom_call.1} parent=1 // pred_region
      _
    $region37: #{tpu_custom_call.1} parent=1 // pred_fallthru
      _
    // Predicated region
    $region38: #{tpu_custom_call.1} parent=1 // pred_check
      _
    $region39: #{tpu_custom_call.1} parent=1 // pred_check_branch
      %92 = sbr.rel (0) target = $region41
    $region40: #{tpu_custom_call.1} parent=1 // pred_region
      _
    $region41: #{tpu_custom_call.1} parent=1 // pred_fallthru
      _
    %93 = vsyncpa [#allocation4], 1
    %94 = vsyncpa [#allocation6], 1

</llo_original>
